<compile_context>
chip_gen: v7x
topology: tpu7x:2x2x1
jax: 0.10.0
libtpu: 0.0.40
codegen_flags: <defaults>
</compile_context>

<pallas_src>
import jax
import jax.numpy as jnp
from jax.experimental import pallas as pl
from jax.experimental.pallas import tpu as pltpu


def _round_up(x, m):
    return ((x + m - 1) // m) * m


def _critic_kernel(obs_ref, w_ref, bias_ref, v_ref, b3_ref, out_ref):
    # One fused bf16 MXU matmul with f32 accumulation:
    # per-node lin1 (BN folded) + lin_dist + lin_time.
    h = jnp.dot(obs_ref[...], w_ref[...], preferred_element_type=jnp.float32)
    h = jnp.maximum(h + bias_ref[...], 0.0)          # bias + ReLU (f32, VPU)
    # node-mean + concat + lin3(3H -> 1) folded into one weighted lane reduce.
    out_ref[...] = (jnp.sum(h * v_ref[...], axis=-1, keepdims=True)
                    + b3_ref[...])


def make_fused_params(params, *, n_nodes, num_features, hidden_dim):
    """Fold BN + pack lin1 / lin_dist / lin_time / lin3 into kernel operands.

    Call ONCE per parameter set (hoisted out of the forward hot path).
    Returns dict with W (bf16, (D, C)), bias/v ((1, C) f32), b3 ((1,1) f32).
    """
    F, H, N = num_features, hidden_dim, n_nodes
    D = 5 + N * F
    C = N * H + 2 * H
    f32 = jnp.float32

    # ---- fold BatchNorm1d (eval-mode running stats) into lin1 ----
    eps = 1e-5
    scale = params["bn_gamma"].astype(f32) / jnp.sqrt(
        params["bn_var"].astype(f32) + eps)                       # (H,)
    w1f = params["w1"].astype(f32) * scale[None, :]               # (F, H)
    b1f = ((params["b1"].astype(f32) - params["bn_mean"].astype(f32)) * scale
           + params["bn_beta"].astype(f32))                       # (H,)

    # ---- block-diagonal per-node lin1 weight: (N*F, N*H) ----
    blockdiag = jnp.einsum("nm,fh->nfmh", jnp.eye(N, dtype=f32), w1f)
    blockdiag = blockdiag.reshape(N * F, N * H)

    # ---- fused block-structured weight (D, C), assembled in f32 ----
    top = jnp.zeros((5, C), f32)
    top = top.at[1:5, N * H:N * H + H].set(params["w_dist"].astype(f32))
    top = top.at[0:1, N * H + H:].set(params["w_time"].astype(f32))
    bottom = jnp.concatenate(
        [blockdiag, jnp.zeros((N * F, 2 * H), f32)], axis=1)
    W = jnp.concatenate([top, bottom], axis=0)                    # (D, C)

    bias = jnp.concatenate(
        [jnp.tile(b1f, N),
         params["b_dist"].astype(f32),
         params["b_time"].astype(f32)])[None, :]                  # (1, C)

    # lin3 row-vector: node columns share w3[:H] scaled by 1/N (mean fold).
    w3 = params["w3"][:, 0].astype(f32)
    v = jnp.concatenate(
        [jnp.tile(w3[:H] / N, N), w3[H:2 * H], w3[2 * H:]])[None, :]  # (1, C)
    b3 = params["b3"].reshape(1, 1).astype(f32)

    return dict(W=W.astype(jnp.bfloat16),   # streamed MXU operand: bf16
                bias=bias, v=v, b3=b3)      # epilogue operands stay f32


def node_mlp_critic4time(obs, fused, *, block_b=2048, min_steps=2):
    """Forward pass.  obs: (B, 5 + N*F) float.  Returns (B, 1) float32."""
    W, bias, v, b3 = fused["W"], fused["bias"], fused["v"], fused["b3"]
    D, C = W.shape

    # bf16 at the pallas_call boundary halves the dominant HBM stream and
    # enables the native bf16 MXU path (no-op if obs is already bf16).
    x = obs.reshape(-1, D).astype(jnp.bfloat16)
    B = x.shape[0]

    # Batch tile: as large as block_b allows while keeping >= min_steps grid
    # steps (so the "parallel" axis can split across v7x's 2 TensorCores) and
    # TB % 8 == 0 (layout rule), unless the tile is the full (tiny) batch.
    assert block_b % 8 == 0, "block_b must be a multiple of 8"
    if B <= 8:
        TB = B                         # full extent: no divisibility needed
    else:
        TB = min(block_b, _round_up(pl.cdiv(B, min_steps), 8))
    grid = (pl.cdiv(B, TB),)

    full = lambda i: (0, 0)            # weights resident across the grid
    return pl.pallas_call(
        _critic_kernel,
        out_shape=jax.ShapeDtypeStruct((B, 1), jnp.float32),
        grid=grid,
        in_specs=[
            pl.BlockSpec((TB, D), lambda i: (i, 0)),   # obs tile (streamed bf16)
            pl.BlockSpec((D, C), full),                # fused weight (bf16)
            pl.BlockSpec((1, C), full),                # fused bias (f32)
            pl.BlockSpec((1, C), full),                # lin3/mean lane weights
            pl.BlockSpec((1, 1), full),                # lin3 bias
        ],
        out_specs=pl.BlockSpec((TB, 1), lambda i: (i, 0)),
        compiler_params=pltpu.CompilerParams(
            dimension_semantics=("parallel",),
            vmem_limit_bytes=32 * 1024 * 1024,
        ),
    )(x, W, bias, v, b3)


def _reference_forward(obs, params, *, n_nodes, num_features):
    """Pure-JAX f32 reference mirroring the PyTorch forward (eval mode)."""
    x = obs.reshape(-1, 5 + n_nodes * num_features)
    B = x.shape[0]
    t_in = x[:, 0:1]
    d_in = x[:, 1:5]
    xn = x[:, 5:].reshape(-1, num_features)
    eps = 1e-5
    h = xn @ params["w1"] + params["b1"]
    h = (h - params["bn_mean"]) / jnp.sqrt(params["bn_var"] + eps)
    h = h * params["bn_gamma"] + params["bn_beta"]
    h = jnp.maximum(h, 0.0)
    h = h.reshape(B, n_nodes, -1).mean(axis=1)
    d = jnp.maximum(d_in @ params["w_dist"] + params["b_dist"], 0.0)
    t = jnp.maximum(t_in @ params["w_time"] + params["b_time"], 0.0)
    feat = jnp.concatenate([h, d, t], axis=1)
    return feat @ params["w3"] + params["b3"]


if __name__ == "__main__":
    input_dim, hidden_dim, n_nodes = 12, 32, 8
    D = 5 + n_nodes * input_dim

    key = jax.random.PRNGKey(0)
    ks = jax.random.split(key, 16)

    def u(k, shape, scale=0.1):
        return jax.random.uniform(k, shape, jnp.float32, -scale, scale)

    params = dict(
        w1=u(ks[0], (input_dim, hidden_dim)),
        b1=u(ks[1], (hidden_dim,)),
        bn_gamma=1.0 + u(ks[2], (hidden_dim,)),
        bn_beta=u(ks[3], (hidden_dim,)),
        bn_mean=u(ks[4], (hidden_dim,)),
        bn_var=1.0 + jnp.abs(u(ks[5], (hidden_dim,))),
        w_dist=u(ks[6], (4, hidden_dim)),
        b_dist=u(ks[7], (hidden_dim,)),
        w_time=u(ks[8], (1, hidden_dim)),
        b_time=u(ks[9], (hidden_dim,)),
        w3=u(ks[10], (3 * hidden_dim, 1)),
        b3=u(ks[11], (1,)),
    )

    # Hoisted: fused operands built once per parameter set.
    fused = make_fused_params(params, n_nodes=n_nodes,
                              num_features=input_dim, hidden_dim=hidden_dim)
    fused = jax.tree_util.tree_map(jax.block_until_ready, fused)

    # bf16 streamed operands -> relaxed tolerance vs. the f32 reference.
    TOL = dict(atol=2e-2, rtol=2e-2)

    # --- small single-tile case (B=2, full-extent tile) ---
    B = 2
    obs = jax.random.normal(ks[12], (B, D), jnp.float32)
    out = jax.block_until_ready(node_mlp_critic4time(obs, fused))
    ref = _reference_forward(obs, params, n_nodes=n_nodes,
                             num_features=input_dim)
    assert out.shape == (B, 1)
    assert jnp.allclose(out, ref, **TOL), (out, ref)

    # --- multi-tile case exercising the batch grid (>=2 grid steps) ---
    B2 = 256
    obs2 = jax.random.normal(ks[13], (B2, D), jnp.float32)
    out2 = jax.block_until_ready(node_mlp_critic4time(obs2, fused))
    ref2 = _reference_forward(obs2, params, n_nodes=n_nodes,
                              num_features=input_dim)
    assert out2.shape == (B2, 1)
    assert jnp.allclose(out2, ref2, **TOL)

    # --- ragged batch: last grid step is a partial tile ---
    B3 = 250
    obs3 = jax.random.normal(ks[14], (B3, D), jnp.float32)
    out3 = jax.block_until_ready(node_mlp_critic4time(obs3, fused))
    ref3 = _reference_forward(obs3, params, n_nodes=n_nodes,
                              num_features=input_dim)
    assert out3.shape == (B3, 1)
    assert jnp.allclose(out3, ref3, **TOL)

    print("KERNEL_OK")
</pallas_src>

<mosaic_0001>
module attributes {stable_mosaic.version = 11 : i64} {
  func.func @_critic_kernel(%arg0: i32, %arg1: memref<2x101xbf16, #tpu.memory_space<vmem>>, %arg2: memref<101x320xbf16, #tpu.memory_space<vmem>>, %arg3: memref<1x320xf32, #tpu.memory_space<vmem>>, %arg4: memref<1x320xf32, #tpu.memory_space<vmem>>, %arg5: memref<1x1xf32, #tpu.memory_space<vmem>>, %arg6: memref<2x1xf32, #tpu.memory_space<vmem>>) attributes {dimension_semantics = [#tpu.dimension_semantics<parallel>], iteration_bounds = array<i64: 1>, scalar_prefetch = 0 : i64, scratch_operands = 0 : i64, tpu.core_type = #tpu.core_type<tc>, window_params = [{transform_indices = @transform_0, window_bounds = array<i64: 2, 101>}, {pipeline_mode = #tpu.pipeline_mode<synchronous>, transform_indices = @transform_1, window_bounds = array<i64: 101, 320>}, {pipeline_mode = #tpu.pipeline_mode<synchronous>, transform_indices = @transform_2, window_bounds = array<i64: 1, 320>}, {pipeline_mode = #tpu.pipeline_mode<synchronous>, transform_indices = @transform_3, window_bounds = array<i64: 1, 320>}, {pipeline_mode = #tpu.pipeline_mode<synchronous>, transform_indices = @transform_4, window_bounds = array<i64: 1, 1>}, {transform_indices = @transform_5, window_bounds = array<i64: 2, 1>}]} {
    %c0 = arith.constant 0 : index
    %c0_0 = arith.constant 0 : index
    %0 = vector.load %arg1[%c0, %c0_0] : memref<2x101xbf16, #tpu.memory_space<vmem>>, vector<2x101xbf16>
    %c0_1 = arith.constant 0 : index
    %c0_2 = arith.constant 0 : index
    %1 = vector.load %arg2[%c0_1, %c0_2] : memref<101x320xbf16, #tpu.memory_space<vmem>>, vector<101x320xbf16>
    %cst = arith.constant dense<0.000000e+00> : vector<2x320xf32>
    %2 = tpu.matmul %0, %1, %cst {dimension_numbers = #tpu.dot_dimension_numbers<[1], [0], [0], [1], [0, 0, 1, 1], [], []>} : vector<2x101xbf16>, vector<101x320xbf16>, vector<2x320xf32> -> vector<2x320xf32>
    %c0_3 = arith.constant 0 : index
    %c0_4 = arith.constant 0 : index
    %3 = vector.load %arg3[%c0_3, %c0_4] : memref<1x320xf32, #tpu.memory_space<vmem>>, vector<1x320xf32>
    %4 = vector.broadcast %3 : vector<1x320xf32> to vector<2x320xf32>
    %5 = arith.addf %2, %4 : vector<2x320xf32>
    %cst_5 = arith.constant 0.000000e+00 : f32
    %6 = vector.broadcast %cst_5 : f32 to vector<2x320xf32>
    %7 = arith.maximumf %5, %6 : vector<2x320xf32>
    %c0_6 = arith.constant 0 : index
    %c0_7 = arith.constant 0 : index
    %8 = vector.load %arg4[%c0_6, %c0_7] : memref<1x320xf32, #tpu.memory_space<vmem>>, vector<1x320xf32>
    %9 = vector.broadcast %8 : vector<1x320xf32> to vector<2x320xf32>
    %10 = arith.mulf %7, %9 : vector<2x320xf32>
    %cst_8 = arith.constant dense<0.000000e+00> : vector<2xf32>
    %11 = vector.multi_reduction <add>, %10, %cst_8 [1] : vector<2x320xf32> to vector<2xf32>
    %12 = vector.shape_cast %11 : vector<2xf32> to vector<2x1xf32>
    %c0_9 = arith.constant 0 : index
    %c0_10 = arith.constant 0 : index
    %13 = vector.load %arg5[%c0_9, %c0_10] : memref<1x1xf32, #tpu.memory_space<vmem>>, vector<1x1xf32>
    %14 = vector.broadcast %13 : vector<1x1xf32> to vector<2x1xf32>
    %15 = arith.addf %12, %14 : vector<2x1xf32>
    %c0_11 = arith.constant 0 : index
    %c0_12 = arith.constant 0 : index
    %16 = vector.load %arg6[%c0_11, %c0_12] : memref<2x1xf32, #tpu.memory_space<vmem>>, vector<2x1xf32>
    tpu.vector_store %arg6[%c0_11, %c0_12], %15 {strides = array<i32>} : memref<2x1xf32, #tpu.memory_space<vmem>>, vector<2x1xf32>,
    return
  }
  func.func @transform_0(%arg0: i32) -> (i32, i32) {
    %c0_i32 = arith.constant 0 : i32
    %c0_i32_0 = arith.constant 0 : i32
    return %arg0, %c0_i32 : i32, i32
  }
  func.func @transform_1(%arg0: i32) -> (i32, i32) {
    %c0_i32 = arith.constant 0 : i32
    %c0_i32_0 = arith.constant 0 : i32
    %c0_i32_1 = arith.constant 0 : i32
    return %c0_i32, %c0_i32_0 : i32, i32
  }
  func.func @transform_2(%arg0: i32) -> (i32, i32) {
    %c0_i32 = arith.constant 0 : i32
    %c0_i32_0 = arith.constant 0 : i32
    %c0_i32_1 = arith.constant 0 : i32
    return %c0_i32, %c0_i32_0 : i32, i32
  }
  func.func @transform_3(%arg0: i32) -> (i32, i32) {
    %c0_i32 = arith.constant 0 : i32
    %c0_i32_0 = arith.constant 0 : i32
    %c0_i32_1 = arith.constant 0 : i32
    return %c0_i32, %c0_i32_0 : i32, i32
  }
  func.func @transform_4(%arg0: i32) -> (i32, i32) {
    %c0_i32 = arith.constant 0 : i32
    %c0_i32_0 = arith.constant 0 : i32
    %c0_i32_1 = arith.constant 0 : i32
    return %c0_i32, %c0_i32_0 : i32, i32
  }
  func.func @transform_5(%arg0: i32) -> (i32, i32) {
    %c0_i32 = arith.constant 0 : i32
    %c0_i32_0 = arith.constant 0 : i32
    return %arg0, %c0_i32 : i32, i32
  }
}

</mosaic_0001>

<llo_original>
// kernel: tpu_custom_call.1
$region0: #{tpu_custom_call.1}
  #allocation0 [shape = 'u32[]', space=smem, size = 0x4, offset = 0x4, fixed_abs, tag = 'smem constant byte address 0x4 - core index']
  #allocation1 [shape = 'u32[144,128]{1,0:T(1,128)}', space=vmem, size = 0x12000, scoped, tag = 'internal scratch']
  #allocation2 [shape = 'f32[1,1]{1,0:T(1,128)S(1)}', space=vmem, size = 0x200, scoped, tag = 'scoped memory for tpu_custom_call.1']
  %s0 = inlined_call_operand.vmem [shape: bf16[2,101], index: 0, kind: input, shape index: {}]
  %s1 = inlined_call_operand.hbm [shape: bf16[101,320], index: 1, kind: input, shape index: {}]
  %s2 = inlined_call_operand.vmem [shape: f32[1,320], index: 2, kind: input, shape index: {}]
  %s3 = inlined_call_operand.vmem [shape: f32[1,320], index: 3, kind: input, shape index: {}]
  %s4 = inlined_call_operand.<no memory space> [shape: f32[1,1], index: 4, kind: input, shape index: {}]
  %s5 = inlined_call_operand.vmem [shape: f32[2,1], index: 5, kind: output, shape index: {}]
  %s6 = sld [smem:[#allocation0]]
  $region34: #{tpu_custom_call.1} parent=0
    _
  %s8 = ssub.s32 1, %s6
  %s9 = scalar_select 0, %s8, %s6
  %v10 = vstv %s4
  %11 = vst [vmem:[#allocation2] sm:$0x1] %v10
  $region1: #{tpu_custom_call.1} parent=0
    #allocation3 [shape = 'u8[79872]{0}', space=vmem, size = 0x13800, scoped, tag = 'input window, operand 1, single buffered']
    #allocation4 [shape = 's32[1]{0}', space=sflag, size = 0x4, scoped, tag = 'scoped memory for tpu_custom_call.1']
    %12 = vsyncpa [#allocation4], 0
    // Predicated region
    $region2: #{tpu_custom_call.1} parent=1 // pred_check
      _
    $region3: #{tpu_custom_call.1} parent=1 // pred_check_branch
      %14 = sbr.rel (0) target = $region5
    $region4: #{tpu_custom_call.1} parent=1 // pred_region
      _
    $region5: #{tpu_custom_call.1} parent=1 // pred_fallthru
      _
    // Predicated region
    $region6: #{tpu_custom_call.1} parent=1 // pred_check
      _
    $region7: #{tpu_custom_call.1} parent=1 // pred_check_branch
      %16 = sbr.rel (0) target = $region9
    $region8: #{tpu_custom_call.1} parent=1 // pred_region
      %s18 = ssub.s32 2496, 2496
      %19 = vsyncadd [#allocation4], %s18
      %s20 = sshll.u32 [#allocation3], 4
      %s21 = int_to_ptr.vmem [resolvable:$true] %s20
      %26 = dma.hbm_to_vmem [thread:$0]  %s1, 2496, %s21, [#allocation4], 192, 192, 12
    $region9: #{tpu_custom_call.1} parent=1 // pred_fallthru
      _
    // Predicated region
    $region10: #{tpu_custom_call.1} parent=1 // pred_check
      _
    $region11: #{tpu_custom_call.1} parent=1 // pred_check_branch
      %28 = sbr.rel (0) target = $region13
    $region12: #{tpu_custom_call.1} parent=1 // pred_region
      _
    $region13: #{tpu_custom_call.1} parent=1 // pred_fallthru
      _
    // Predicated region
    $region14: #{tpu_custom_call.1} parent=1 // pred_check
      _
    $region15: #{tpu_custom_call.1} parent=1 // pred_check_branch
      %30 = sbr.rel (0) target = $region17
    $region16: #{tpu_custom_call.1} parent=1 // pred_region
      _
    $region17: #{tpu_custom_call.1} parent=1 // pred_fallthru
      _
    // Predicated region
    $region18: #{tpu_custom_call.1} parent=1 // pred_check
      _
    $region19: #{tpu_custom_call.1} parent=1 // pred_check_branch
      %32 = sbr.rel (0) target = $region21
    $region20: #{tpu_custom_call.1} parent=1 // pred_region
      _
    $region21: #{tpu_custom_call.1} parent=1 // pred_fallthru
      _
    // Predicated region
    $region22: #{tpu_custom_call.1} parent=1 // pred_check
      _
    $region23: #{tpu_custom_call.1} parent=1 // pred_check_branch
      %34 = sbr.rel (0) target = $region25
    $region24: #{tpu_custom_call.1} parent=1 // pred_region
      %35 = dma.done [#allocation4], 2496
    $region25: #{tpu_custom_call.1} parent=1 // pred_fallthru
      _
    %v37 = vld [vmem:[%s0] sm:$0x1]
    %v38 = vld [vmem:[#allocation3] sm:$0xff]
    %v39 = vld [vmem:[#allocation3 + $0x8] sm:$0xf]
    %v40 = vld [vmem:[#allocation3 + $0xc] sm:$0xff]
    %v41 = vld [vmem:[#allocation3 + $0x14] sm:$0xf]
    %v42 = vld [vmem:[#allocation3 + $0x18] sm:$0xff]
    %v43 = vld [vmem:[#allocation3 + $0x20] sm:$0xf]
    %v44 = vld [vmem:[#allocation3 + $0x24] sm:$0xff]
    %v45 = vld [vmem:[#allocation3 + $0x2c] sm:$0xf]
    %v46 = vld [vmem:[#allocation3 + $0x30] sm:$0xff]
    %v47 = vld [vmem:[#allocation3 + $0x38] sm:$0xf]
    %v48 = vld [vmem:[#allocation3 + $0x3c] sm:$0xff]
    %v49 = vld [vmem:[#allocation3 + $0x44] sm:$0xf]
    %v50 = vld [vmem:[#allocation3 + $0x48] sm:$0xff]
    %v51 = vld [vmem:[#allocation3 + $0x50] sm:$0xf]
    %v52 = vld [vmem:[#allocation3 + $0x54] sm:$0xff]
    %v53 = vld [vmem:[#allocation3 + $0x5c] sm:$0xf]
    %v54 = vld [vmem:[#allocation3 + $0x60] sm:$0xff]
    %v55 = vld [vmem:[#allocation3 + $0x68] sm:$0xf]
    %v56 = vld [vmem:[#allocation3 + $0x6c] sm:$0xff]
    %v57 = vld [vmem:[#allocation3 + $0x74] sm:$0xf]
    %v58 = vld [vmem:[#allocation3 + $0x78] sm:$0xff]
    %v59 = vld [vmem:[#allocation3 + $0x80] sm:$0xf]
    %v60 = vld [vmem:[#allocation3 + $0x84] sm:$0xff]
    %v61 = vld [vmem:[#allocation3 + $0x8c] sm:$0xf]
    %v62 = vld [vmem:[#allocation3 + $0x90] sm:$0x77]
    %v63 = vld [vmem:[#allocation3 + $0x98] sm:$0x7]
    %v64 = vld [vmem:[%s2] sm:$0x7]
    %v66 = vlaneseq
    %v67 = vshrl.u32 %v66, 7
    %v68 = vsub.s32 0, %v67
    %v69 = vrot.slane %v64, %v68
    %v70 = vlaneseq
    %v71 = vshrl.u32 %v70, 7
    %v72 = vsub.s32 1, %v71
    %v73 = vrot.slane %v64, %v72
    %v74 = vlaneseq
    %v75 = vshrl.u32 %v74, 7
    %v76 = vsub.s32 2, %v75
    %v77 = vrot.slane %v64, %v76
    %v107 = vunpack.c.l.b16 %v38
    %v108 = vunpack.c.h.b16 %v38
    %v109 = vunpack.c.l.b16 %v39
    %v110 = vunpack.c.l.b16 %v40
    %v111 = vunpack.c.h.b16 %v40
    %v112 = vunpack.c.l.b16 %v41
    %v113 = vunpack.c.l.b16 %v42
    %v114 = vunpack.c.h.b16 %v42
    %v115 = vunpack.c.l.b16 %v43
    %v116 = vunpack.c.l.b16 %v44
    %v117 = vunpack.c.h.b16 %v44
    %v118 = vunpack.c.l.b16 %v45
    %v119 = vunpack.c.l.b16 %v46
    %v120 = vunpack.c.h.b16 %v46
    %v121 = vunpack.c.l.b16 %v47
    %v122 = vunpack.c.l.b16 %v48
    %v123 = vunpack.c.h.b16 %v48
    %v124 = vunpack.c.l.b16 %v49
    %v125 = vunpack.c.l.b16 %v50
    %v126 = vunpack.c.h.b16 %v50
    %v127 = vunpack.c.l.b16 %v51
    %v128 = vunpack.c.l.b16 %v52
    %v129 = vunpack.c.h.b16 %v52
    %v130 = vunpack.c.l.b16 %v53
    %v131 = vunpack.c.l.b16 %v54
    %v132 = vunpack.c.h.b16 %v54
    %v133 = vunpack.c.l.b16 %v55
    %v134 = vunpack.c.l.b16 %v56
    %v135 = vunpack.c.h.b16 %v56
    %v136 = vunpack.c.l.b16 %v57
    %v137 = vunpack.c.l.b16 %v58
    %v138 = vunpack.c.h.b16 %v58
    %v139 = vunpack.c.l.b16 %v59
    %v140 = vunpack.c.l.b16 %v60
    %v141 = vunpack.c.h.b16 %v60
    %v142 = vunpack.c.l.b16 %v61
    %v143 = vunpack.c.l.b16 %v62
    %v144 = vunpack.c.h.b16 %v62
    %v145 = vunpack.c.l.b16 %v63
    %v146 = vpack.c.b16 %v110, %v107
    %v147 = vpack.c.b16 %v111, %v108
    %v148 = vpack.c.b16 %v112, %v109
    %v149 = vpack.c.b16 %v116, %v113
    %v150 = vpack.c.b16 %v117, %v114
    %v151 = vpack.c.b16 %v118, %v115
    %v152 = vpack.c.b16 %v122, %v119
    %v153 = vpack.c.b16 %v123, %v120
    %v154 = vpack.c.b16 %v124, %v121
    %v155 = vpack.c.b16 %v128, %v125
    %v156 = vpack.c.b16 %v129, %v126
    %v157 = vpack.c.b16 %v130, %v127
    %v158 = vpack.c.b16 %v134, %v131
    %v159 = vpack.c.b16 %v135, %v132
    %v160 = vpack.c.b16 %v136, %v133
    %v161 = vpack.c.b16 %v140, %v137
    %v162 = vpack.c.b16 %v141, %v138
    %v163 = vpack.c.b16 %v142, %v139
    %v164 = vpack.c.b16 %v143, %v143
    %v165 = vpack.c.b16 %v144, %v144
    %v166 = vpack.c.b16 %v145, %v145
    %vm185 = vcmask 826368
    %v187 = vsel %vm185, %v37, 0
    %vm189 = vcmask 1041408
    %vm190 = vcmask 1042432
    %v191 = vsel %vm189, 4294967295, 65535
    %v192 = vsel %vm190, %v191, 0
    %v194 = vand.u32 %v164, %v192
    %v197 = vand.u32 %v165, %v192
    %v200 = vand.u32 %v166, %v192
    %202 = vmatprep.subr.bf16.mxu0 %v147
    %203 = vmatpush1.bf16.msra.mxu0 %v146
    %204 = vmatprep.subr.bf16.mxu0 %v150
    %205 = vmatpush1.bf16.msra.mxu0 %v149
    %206 = vmatprep.subr.bf16.mxu0 %v153
    %207 = vmatpush1.bf16.msra.mxu0 %v152
    %208 = vmatprep.subr.bf16.mxu0 %v156
    %209 = vmatpush1.bf16.msra.mxu0 %v155
    %210 = vmatprep.subr.bf16.mxu0 %v159
    %211 = vmatpush1.bf16.msra.mxu0 %v158
    %212 = vmatprep.subr.bf16.mxu0 %v162
    %213 = vmatpush1.bf16.msra.mxu0 %v161
    %214 = vmatprep.subr.bf16.mxu0 %v197
    %215 = vmatpush1.bf16.msra.mxu0 %v194
    %216 = vmatprep.subr.bf16.mxu0 0
    %217 = vmatpush1.bf16.msra.mxu0 0
    %218 = vmatprep.subr.bf16.mxu0 0
    %219 = vmatpush1.bf16.msra.mxu0 0
    %220 = vmatprep.subr.bf16.mxu0 0
    %221 = vmatpush1.bf16.msra.mxu0 0
    %222 = vmatprep.subr.bf16.mxu0 0
    %223 = vmatpush1.bf16.msra.mxu0 0
    %224 = vmatprep.subr.bf16.mxu0 0
    %225 = vmatpush1.bf16.msra.mxu0 0
    %226 = vmatprep.subr.bf16.mxu0 0
    %227 = vmatpush1.bf16.msra.mxu0 0
    %228 = vmatprep.subr.bf16.mxu0 0
    %229 = vmatpush1.bf16.msra.mxu0 0
    %230 = vmatprep.subr.bf16.mxu0 0
    %231 = vmatpush1.bf16.msra.mxu0 0
    %232 = vmatprep.subr.bf16.mxu0 0
    %233 = vmatpush1.bf16.msra.mxu0 0
    %234 = vmatprep.mubr.bf16.mxu0 0
    %235 = vmatmul.mubr.bf16.gmra.mrb[0].mxu0 %v187
    %v236 = vpop.f32.mrb[0].mxu0
    %v237 = vadd.f32 %v69, %v236
    %v238 = vpop.f32.mrb[0].mxu0
    %v239 = vadd.f32 %v73, %v238
    %v240 = vpop.f32.mrb[0].mxu0
    %v241 = vpop.f32.mrb[0].mxu0
    %242 = vdwg.mxu0
    %243 = vmatprep.subr.bf16.mxu0 0
    %244 = vmatpush1.bf16.msra.mxu0 %v148
    %245 = vmatprep.subr.bf16.mxu0 0
    %246 = vmatpush1.bf16.msra.mxu0 %v151
    %247 = vmatprep.subr.bf16.mxu0 0
    %248 = vmatpush1.bf16.msra.mxu0 %v154
    %249 = vmatprep.subr.bf16.mxu0 0
    %250 = vmatpush1.bf16.msra.mxu0 %v157
    %251 = vmatprep.subr.bf16.mxu0 0
    %252 = vmatpush1.bf16.msra.mxu0 %v160
    %253 = vmatprep.subr.bf16.mxu0 0
    %254 = vmatpush1.bf16.msra.mxu0 %v163
    %255 = vmatprep.subr.bf16.mxu0 0
    %256 = vmatpush1.bf16.msra.mxu0 %v200
    %257 = vmatprep.subr.bf16.mxu0 0
    %258 = vmatpush1.bf16.msra.mxu0 0
    %259 = vmatprep.subr.bf16.mxu0 0
    %260 = vmatpush1.bf16.msra.mxu0 0
    %261 = vmatprep.subr.bf16.mxu0 0
    %262 = vmatpush1.bf16.msra.mxu0 0
    %263 = vmatprep.subr.bf16.mxu0 0
    %264 = vmatpush1.bf16.msra.mxu0 0
    %265 = vmatprep.subr.bf16.mxu0 0
    %266 = vmatpush1.bf16.msra.mxu0 0
    %267 = vmatprep.subr.bf16.mxu0 0
    %268 = vmatpush1.bf16.msra.mxu0 0
    %269 = vmatprep.subr.bf16.mxu0 0
    %270 = vmatpush1.bf16.msra.mxu0 0
    %271 = vmatprep.subr.bf16.mxu0 0
    %272 = vmatpush1.bf16.msra.mxu0 0
    %273 = vmatprep.subr.bf16.mxu0 0
    %274 = vmatpush1.bf16.msra.mxu0 0
    %275 = vmatprep.mubr.bf16.mxu0 0
    %276 = vmatmul.mubr.bf16.gmra.mrb[0].mxu0 %v187
    %v277 = vpop.f32.mrb[0].mxu0
    %v278 = vadd.f32 %v77, %v277
    %v279 = vpop.f32.mrb[0].mxu0
    %v280 = vpop.f32.mrb[0].mxu0
    %v281 = vpop.f32.mrb[0].mxu0
    %282 = vdwg.mxu0
    %v283 = vmax.f32 %v237, 0.0
    %v284 = vmax.f32 %v239, 0.0
    %v285 = vmax.f32 %v278, 0.0
    %v286 = vld [vmem:[%s3] sm:$0x7]
    %v288 = vlaneseq
    %v289 = vshrl.u32 %v288, 7
    %v290 = vsub.s32 0, %v289
    %v291 = vrot.slane %v286, %v290
    %v292 = vlaneseq
    %v293 = vshrl.u32 %v292, 7
    %v294 = vsub.s32 1, %v293
    %v295 = vrot.slane %v286, %v294
    %v296 = vlaneseq
    %v297 = vshrl.u32 %v296, 7
    %v298 = vsub.s32 2, %v297
    %v299 = vrot.slane %v286, %v298
    %v303 = vmul.f32 %v283, %v291
    %v304 = vmul.f32 %v284, %v295
    %v305 = vmul.f32 %v285, %v299
    %v306 = vsel %vm189, %v303, 0.0
    %v307 = vsel %vm189, %v304, 0.0
    %v308 = vadd.f32 %v306, %v307
    %vm309 = vcmask 517120
    %v310 = vsel %vm309, %v305, 0.0
    %v311 = vadd.f32 %v308, %v310
    %312 = vadd.xlane.f32.xlu0 %v311
    %v313 = vpop.xlane.xlu0 %312
    %v314 = vld [vmem:[#allocation2] sm:$0x1]
    %v316 = vlaneseq
    %v317 = vshrl.u32 %v316, 7
    %v318 = vsub.s32 0, %v317
    %v319 = vrot.slane %v314, %v318
    %v321 = vadd.f32 %v313, %v319
    %vm322 = vcmask 1024
    %323 = vst.msk [vmem:[%s5] sm:$0x3] %vm322, %v321
    // Predicated region
    $region26: #{tpu_custom_call.1} parent=1 // pred_check
      _
    $region27: #{tpu_custom_call.1} parent=1 // pred_check_branch
      %325 = sbr.rel (0) target = $region29
    $region28: #{tpu_custom_call.1} parent=1 // pred_region
      _
    $region29: #{tpu_custom_call.1} parent=1 // pred_fallthru
      _
    // Predicated region
    $region30: #{tpu_custom_call.1} parent=1 // pred_check
      _
    $region31: #{tpu_custom_call.1} parent=1 // pred_check_branch
      %327 = sbr.rel (0) target = $region33
    $region32: #{tpu_custom_call.1} parent=1 // pred_region
      _
    $region33: #{tpu_custom_call.1} parent=1 // pred_fallthru
      _
    %328 = vsyncpa [#allocation4], 1

</llo_original>
